<compile_context>
chip_gen: v5e
topology: v5e:2x2
jax: 0.10.0
libtpu: 0.0.40
codegen_flags: <defaults>
</compile_context>

<pallas_src>
import jax
import jax.numpy as jnp
from jax.experimental import pallas as pl
from jax.experimental.pallas import tpu as pltpu

_LANE = 128
_SCALE = 1.0 / 100000.0


# --------------------------------------------------------------------------- #
# Kernel
# --------------------------------------------------------------------------- #
def _make_kernel(bt, mxu_dtype):
    def kernel(q_ref, k_ref, v_ref, o_ref, qs_sc, m_sc, l_sc, acc_sc):
        # q_ref:  (TQ, D)           shared across the whole batch
        # k_ref:  (BT, TK, D)       v_ref: (BT, TK, Dv)
        # o_ref:  (BT, TQ, Dv)
        # qs_sc:  (TQ, D)           scaled query in MXU dtype (written at ki==0)
        # m_sc/l_sc: (BT, TQ, 128)  running max / denom, lane-replicated (f32)
        # acc_sc: (BT, TQ, Dv)      f32 output accumulator
        ki = pl.program_id(2)

        @pl.when(ki == 0)
        def _init():
            # Fold the 1/100000 score scale into q once per (b, qi) block
            # (D elements/row instead of Sk) and keep it resident over ki.
            qs_sc[...] = (q_ref[...].astype(jnp.float32) * _SCALE).astype(qs_sc.dtype)
            m_sc[...] = jnp.full_like(m_sc, -jnp.inf)
            l_sc[...] = jnp.zeros_like(l_sc)
            acc_sc[...] = jnp.zeros_like(acc_sc)

        q_s = qs_sc[...]                                    # (TQ, D), MXU dtype

        # Statically-unrolled per-batch 2-D matmuls: q stays stationary (no
        # (BT,TQ,D) broadcast materialization) and QK^T contracts over D
        # directly (no materialized k transpose).
        for b in range(bt):
            k_b = k_ref[b].astype(mxu_dtype)                # (TK, D)
            v_b = v_ref[b].astype(mxu_dtype)                # (TK, Dv)

            s = jax.lax.dot_general(
                q_s, k_b,
                dimension_numbers=(((1,), (1,)), ((), ())),
                preferred_element_type=jnp.float32,
            )                                               # (TQ, TK) f32

            # Online (flash) softmax update; math stays f32 (v5e: no bf16 VPU).
            m_prev = m_sc[b]                                # (TQ, 128)
            m_new = jnp.maximum(m_prev, jnp.max(s, axis=-1, keepdims=True))
            alpha = jnp.exp(m_prev - m_new)                 # (TQ, 128)
            p = jnp.exp(s - m_new[:, :1])                   # (TQ, TK) f32
            l_sc[b] = alpha * l_sc[b] + jnp.sum(p, axis=-1, keepdims=True)

            pv = jax.lax.dot_general(
                p.astype(mxu_dtype), v_b,
                dimension_numbers=(((1,), (0,)), ((), ())),
                preferred_element_type=jnp.float32,
            )                                               # (TQ, Dv) f32
            acc_sc[b] = alpha[:, :1] * acc_sc[b] + pv
            m_sc[b] = m_new

        # dropout(p=0.1): eval-mode identity (see TODO at top of file).

        @pl.when(ki == pl.num_programs(2) - 1)
        def _finalize():
            inv_l = pl.reciprocal(l_sc[...][:, :, :1], approx=False)   # exact
            o_ref[...] = (acc_sc[...] * inv_l).astype(o_ref.dtype)

    return kernel


# --------------------------------------------------------------------------- #
# Tile selection
# --------------------------------------------------------------------------- #
def _divisors_desc(dim, cap):
    cap = dim if cap is None else max(1, min(cap, dim))
    return [t for t in range(cap, 0, -1) if dim % t == 0]


def _tile_candidates(dim, cap, granules):
    """Divisor tiles of `dim` (<= cap): full dim first (if allowed), then tiles
    aligned to each granule (descending), then any divisor (descending)."""
    divs = _divisors_desc(dim, cap)
    ordered = []
    if cap is None or cap >= dim:
        ordered.append(dim)
    for g in granules:
        ordered.extend(t for t in divs if t % g == 0)
    ordered.extend(divs)
    out = []
    for t in ordered:
        if t not in out:
            out.append(t)
    return out


def _vmem_estimate(bt, tq, tk, d, dv, in_bytes, out_bytes):
    bufs = 2 * (tq * d * in_bytes            # q (double-buffered)
                + bt * tk * d * in_bytes     # k
                + bt * tk * dv * in_bytes    # v
                + bt * tq * dv * out_bytes)  # out
    scratch = (tq * d * 4                    # scaled q
               + 2 * bt * tq * _LANE * 4     # m, l (lane-dense)
               + bt * tq * dv * 4)           # acc
    interm = 3 * tq * tk * 4                 # s/p f32 intermediates + headroom
    return bufs + scratch + interm


def _choose_tiles(B, Sq, Sk, D, Dv, in_bytes, out_bytes, budget,
                  cap_b, cap_q, cap_k):
    sub = 16 if in_bytes == 2 else (32 if in_bytes == 1 else 8)
    tq_cands = _tile_candidates(Sq, cap_q, (sub,))            # sublane dim
    tk_cands = _tile_candidates(Sk, cap_k, (_LANE, sub))      # lane/contraction dim

    def fits(bt, tq, tk):
        return _vmem_estimate(bt, tq, tk, D, Dv, in_bytes, out_bytes) <= budget

    # Priority: TQ (shrinks K/V re-streaming) -> TK (TK == Sk makes the K/V
    # block index qi-invariant so Pallas skips the re-DMA) -> BT.
    TQ, TK = tq_cands[-1], tk_cands[-1]
    done = False
    for tq in tq_cands:
        for tk in tk_cands:
            if fits(1, tq, tk):
                TQ, TK = tq, tk
                done = True
                break
        if done:
            break

    # BT: amortize the ~0.35us/step overhead, but keep >=2 iterations across
    # the "parallel" axes (both TensorCores busy on v7x) and bound the unroll.
    max_unroll = 8
    bt_cap = min(B, cap_b if cap_b else B, max_unroll)
    if Sq // TQ == 1 and B >= 2:
        bt_cap = min(bt_cap, max(1, B // 2))
    BT = 1
    for bt in _divisors_desc(B, bt_cap):
        if fits(bt, TQ, TK):
            BT = bt
            break
    return BT, TQ, TK


# --------------------------------------------------------------------------- #
# Wrapper
# --------------------------------------------------------------------------- #
def sdp_attention(query, key, value, *, mxu_dtype=None,
                  block_b=None, block_q=None, block_k=None):
    """query: (Sq, D); key: (B, Sk, D); value: (B, Sk, Dv) -> (B, Sq, Dv).

    softmax(query @ key^T / 100000, -1) @ value with the 2-D query broadcast
    over the batch dim; dropout is eval-mode identity. `mxu_dtype=jnp.bfloat16`
    feeds the MXU in bf16 (f32 accumulation) for the v6e/v7x fast path.
    """
    Sq, D = query.shape
    B, Sk, Dk = key.shape
    Bv, Skv, Dv = value.shape
    assert D == Dk and B == Bv and Sk == Skv

    out_dtype = query.dtype
    mxu = jnp.dtype(mxu_dtype) if mxu_dtype is not None else jnp.dtype(query.dtype)
    in_bytes = jnp.dtype(query.dtype).itemsize
    out_bytes = jnp.dtype(out_dtype).itemsize

    # Lane-dense output: pad Dv to a multiple of 128 (zero columns drop out of
    # p @ v and are sliced off below) so the writeback uses unmasked stores.
    Dv_p = ((Dv + _LANE - 1) // _LANE) * _LANE
    value_p = value if Dv_p == Dv else jnp.pad(
        value, ((0, 0), (0, 0), (0, Dv_p - Dv)))

    # Generation-aware VMEM budget (v5e/v6e: 128 MiB/core, v7x: 64 MiB/core).
    try:
        vmem_cap = int(getattr(pltpu.get_tpu_info(), "vmem_capacity_bytes",
                               64 * 1024 * 1024))
    except Exception:
        vmem_cap = 64 * 1024 * 1024
    budget = vmem_cap // 2

    BT, TQ, TK = _choose_tiles(B, Sq, Sk, D, Dv_p, in_bytes, out_bytes, budget,
                               block_b, block_q, block_k)
    grid = (B // BT, Sq // TQ, Sk // TK)

    kv_rereads = 1 if TK == Sk else (Sq // TQ)
    cost = pl.CostEstimate(
        flops=2 * B * Sq * Sk * (D + Dv_p),
        transcendentals=B * Sq * Sk,
        bytes_accessed=(int(query.size) * in_bytes
                        + (int(key.size) + int(value_p.size)) * in_bytes * kv_rereads
                        + B * Sq * Dv_p * out_bytes),
    )

    out_p = pl.pallas_call(
        _make_kernel(BT, mxu),
        out_shape=jax.ShapeDtypeStruct((B, Sq, Dv_p), out_dtype),
        grid_spec=pltpu.PrefetchScalarGridSpec(
            num_scalar_prefetch=0,
            grid=grid,
            in_specs=[
                pl.BlockSpec((TQ, D), lambda b, qi, ki: (qi, 0)),            # query
                pl.BlockSpec((BT, TK, D), lambda b, qi, ki: (b, ki, 0)),     # key
                pl.BlockSpec((BT, TK, Dv_p), lambda b, qi, ki: (b, ki, 0)),  # value
            ],
            out_specs=pl.BlockSpec((BT, TQ, Dv_p), lambda b, qi, ki: (b, qi, 0)),
            scratch_shapes=[
                pltpu.VMEM((TQ, D), mxu),                  # scaled query
                pltpu.VMEM((BT, TQ, _LANE), jnp.float32),  # running max m
                pltpu.VMEM((BT, TQ, _LANE), jnp.float32),  # running denom l
                pltpu.VMEM((BT, TQ, Dv_p), jnp.float32),   # output accumulator
            ],
        ),
        compiler_params=pltpu.CompilerParams(
            dimension_semantics=("parallel", "parallel", "arbitrary"),
            vmem_limit_bytes=int(vmem_cap * 0.9),
        ),
        cost_estimate=cost,
    )(query, key, value_p)

    return out_p if Dv_p == Dv else out_p[..., :Dv]


# --------------------------------------------------------------------------- #
# Reference + self-test
# --------------------------------------------------------------------------- #
def _reference(query, key, value):
    qk = jnp.einsum("qd,bkd->bqk", query, key,
                    precision=jax.lax.Precision.HIGHEST) * _SCALE
    p = jax.nn.softmax(qk, axis=-1)
    return jnp.einsum("bqk,bkd->bqd", p, value,
                      precision=jax.lax.Precision.HIGHEST)


if __name__ == "__main__":
    # Small shapes consistent with the module: 2-D query, 3-D key/value.
    B, Sq, Sk, D = 4, 16, 16, 32
    k0 = jax.random.PRNGKey(0)
    kq, kk, kv = jax.random.split(k0, 3)
    query = jax.random.normal(kq, (Sq, D), dtype=jnp.float32)
    key = jax.random.normal(kk, (B, Sk, D), dtype=jnp.float32)
    value = jax.random.normal(kv, (B, Sk, D), dtype=jnp.float32)

    ref = _reference(query, key, value)

    # Multi-tile path: exercises batch blocking, Sq tiling, and the online
    # softmax accumulation across two Sk tiles (grid = (2, 2, 2)).
    out_tiled = sdp_attention(query, key, value, block_b=2, block_q=8, block_k=8)
    # Auto-tiled path: full-dim tiles, K/V DMA'd once per batch group.
    out_full = sdp_attention(query, key, value)
    # bf16 MXU feeds (v6e/v7x fast path) with f32 accumulation / softmax.
    out_bf16 = sdp_attention(query, key, value, mxu_dtype=jnp.bfloat16)
    jax.block_until_ready((out_tiled, out_full, out_bf16))

    assert out_tiled.shape == (B, Sq, D)
    assert jnp.allclose(out_tiled, ref, atol=2e-3, rtol=2e-3)
    assert jnp.allclose(out_full, ref, atol=2e-3, rtol=2e-3)
    assert jnp.allclose(out_bf16, ref, atol=2e-2, rtol=2e-2)

    print("KERNEL_OK")
</pallas_src>

<mosaic_0001>
module attributes {stable_mosaic.version = 11 : i64} {
  func.func @kernel(%arg0: i32, %arg1: i32, %arg2: i32, %arg3: memref<8x32xf32, #tpu.memory_space<vmem>>, %arg4: memref<2x8x32xf32, #tpu.memory_space<vmem>>, %arg5: memref<2x8x128xf32, #tpu.memory_space<vmem>>, %arg6: memref<2x8x128xf32, #tpu.memory_space<vmem>>, %arg7: memref<8x32xf32, #tpu.memory_space<vmem>>, %arg8: memref<2x8x128xf32, #tpu.memory_space<vmem>>, %arg9: memref<2x8x128xf32, #tpu.memory_space<vmem>>, %arg10: memref<2x8x128xf32, #tpu.memory_space<vmem>>) attributes {dimension_semantics = [#tpu.dimension_semantics<parallel>, #tpu.dimension_semantics<parallel>, #tpu.dimension_semantics<arbitrary>], iteration_bounds = array<i64: 2, 2, 2>, scalar_prefetch = 0 : i64, scratch_operands = 4 : i64, tpu.core_type = #tpu.core_type<tc>, window_params = [{transform_indices = @transform_0, window_bounds = array<i64: 8, 32>}, {transform_indices = @transform_1, window_bounds = array<i64: 2, 8, 32>}, {transform_indices = @transform_2, window_bounds = array<i64: 2, 8, 128>}, {transform_indices = @transform_3, window_bounds = array<i64: 2, 8, 128>}]} {
    %c0_i32 = arith.constant 0 : i32
    %0 = arith.cmpi eq, %arg2, %c0_i32 : i32
    %1 = arith.extui %0 : i1 to i32
    %c0_i32_0 = arith.constant 0 : i32
    %2 = arith.cmpi ne, %1, %c0_i32_0 : i32
    scf.if %2 {
      %c0_57 = arith.constant 0 : index
      %c0_58 = arith.constant 0 : index
      %87 = vector.load %arg3[%c0_57, %c0_58] : memref<8x32xf32, #tpu.memory_space<vmem>>, vector<8x32xf32>
      %cst_59 = arith.constant 9.99999974E-6 : f32
      %88 = vector.broadcast %cst_59 : f32 to vector<8x32xf32>
      %89 = arith.mulf %87, %88 : vector<8x32xf32>
      %c0_60 = arith.constant 0 : index
      %c0_61 = arith.constant 0 : index
      %90 = vector.load %arg7[%c0_60, %c0_61] : memref<8x32xf32, #tpu.memory_space<vmem>>, vector<8x32xf32>
      tpu.vector_store %arg7[%c0_60, %c0_61], %89 {strides = array<i32>} : memref<8x32xf32, #tpu.memory_space<vmem>>, vector<8x32xf32>,
      %cst_62 = arith.constant 0xFF800000 : f32
      %91 = vector.broadcast %cst_62 : f32 to vector<2x8x128xf32>
      %c0_63 = arith.constant 0 : index
      %c0_64 = arith.constant 0 : index
      %c0_65 = arith.constant 0 : index
      %92 = vector.load %arg8[%c0_63, %c0_64, %c0_65] : memref<2x8x128xf32, #tpu.memory_space<vmem>>, vector<2x8x128xf32>
      tpu.vector_store %arg8[%c0_63, %c0_64, %c0_65], %91 {strides = array<i32>} : memref<2x8x128xf32, #tpu.memory_space<vmem>>, vector<2x8x128xf32>,
      %cst_66 = arith.constant 0.000000e+00 : f32
      %93 = vector.broadcast %cst_66 : f32 to vector<2x8x128xf32>
      %c0_67 = arith.constant 0 : index
      %c0_68 = arith.constant 0 : index
      %c0_69 = arith.constant 0 : index
      %94 = vector.load %arg9[%c0_67, %c0_68, %c0_69] : memref<2x8x128xf32, #tpu.memory_space<vmem>>, vector<2x8x128xf32>
      tpu.vector_store %arg9[%c0_67, %c0_68, %c0_69], %93 {strides = array<i32>} : memref<2x8x128xf32, #tpu.memory_space<vmem>>, vector<2x8x128xf32>,
      %cst_70 = arith.constant 0.000000e+00 : f32
      %95 = vector.broadcast %cst_70 : f32 to vector<2x8x128xf32>
      %c0_71 = arith.constant 0 : index
      %c0_72 = arith.constant 0 : index
      %c0_73 = arith.constant 0 : index
      %96 = vector.load %arg10[%c0_71, %c0_72, %c0_73] : memref<2x8x128xf32, #tpu.memory_space<vmem>>, vector<2x8x128xf32>
      tpu.vector_store %arg10[%c0_71, %c0_72, %c0_73], %95 {strides = array<i32>} : memref<2x8x128xf32, #tpu.memory_space<vmem>>, vector<2x8x128xf32>,
    } else {
    }
    %c0 = arith.constant 0 : index
    %c0_1 = arith.constant 0 : index
    %3 = vector.load %arg7[%c0, %c0_1] : memref<8x32xf32, #tpu.memory_space<vmem>>, vector<8x32xf32>
    %c0_2 = arith.constant 0 : index
    %c0_3 = arith.constant 0 : index
    %c0_4 = arith.constant 0 : index
    %4 = vector.load %arg4[%c0_2, %c0_3, %c0_4] : memref<2x8x32xf32, #tpu.memory_space<vmem>>, vector<1x8x32xf32>
    %5 = vector.shape_cast %4 : vector<1x8x32xf32> to vector<8x32xf32>
    %c0_5 = arith.constant 0 : index
    %c0_6 = arith.constant 0 : index
    %c0_7 = arith.constant 0 : index
    %6 = vector.load %arg5[%c0_5, %c0_6, %c0_7] : memref<2x8x128xf32, #tpu.memory_space<vmem>>, vector<1x8x128xf32>
    %7 = vector.shape_cast %6 : vector<1x8x128xf32> to vector<8x128xf32>
    %cst = arith.constant dense<0.000000e+00> : vector<8x8xf32>
    %8 = tpu.matmul %3, %5, %cst {dimension_numbers = #tpu.dot_dimension_numbers<[1], [1], [0], [0], [0, 0, 1, 0], [], []>} : vector<8x32xf32>, vector<8x32xf32>, vector<8x8xf32> -> vector<8x8xf32>
    %c0_8 = arith.constant 0 : index
    %c0_9 = arith.constant 0 : index
    %c0_10 = arith.constant 0 : index
    %9 = vector.load %arg8[%c0_8, %c0_9, %c0_10] : memref<2x8x128xf32, #tpu.memory_space<vmem>>, vector<1x8x128xf32>
    %10 = vector.shape_cast %9 : vector<1x8x128xf32> to vector<8x128xf32>
    %cst_11 = arith.constant dense<0xFF800000> : vector<8xf32>
    %11 = vector.multi_reduction <maximumf>, %8, %cst_11 [1] : vector<8x8xf32> to vector<8xf32>
    %12 = vector.shape_cast %11 : vector<8xf32> to vector<8x1xf32>
    %13 = vector.broadcast %12 : vector<8x1xf32> to vector<8x128xf32>
    %14 = arith.maximumf %10, %13 : vector<8x128xf32>
    %15 = arith.subf %10, %14 : vector<8x128xf32>
    %16 = math.exp %15 : vector<8x128xf32>
    %17 = vector.extract_strided_slice %14 {offsets = [0, 0], sizes = [8, 1], strides = [1, 1]} : vector<8x128xf32> to vector<8x1xf32>
    %18 = vector.broadcast %17 : vector<8x1xf32> to vector<8x8xf32>
    %19 = arith.subf %8, %18 : vector<8x8xf32>
    %20 = math.exp %19 : vector<8x8xf32>
    %c0_12 = arith.constant 0 : index
    %c0_13 = arith.constant 0 : index
    %c0_14 = arith.constant 0 : index
    %21 = vector.load %arg9[%c0_12, %c0_13, %c0_14] : memref<2x8x128xf32, #tpu.memory_space<vmem>>, vector<1x8x128xf32>
    %22 = vector.shape_cast %21 : vector<1x8x128xf32> to vector<8x128xf32>
    %23 = arith.mulf %16, %22 : vector<8x128xf32>
    %cst_15 = arith.constant dense<0.000000e+00> : vector<8xf32>
    %24 = vector.multi_reduction <add>, %20, %cst_15 [1] : vector<8x8xf32> to vector<8xf32>
    %25 = vector.shape_cast %24 : vector<8xf32> to vector<8x1xf32>
    %26 = vector.broadcast %25 : vector<8x1xf32> to vector<8x128xf32>
    %27 = arith.addf %23, %26 : vector<8x128xf32>
    %c0_16 = arith.constant 0 : index
    %c0_17 = arith.constant 0 : index
    %c0_18 = arith.constant 0 : index
    %28 = vector.load %arg9[%c0_16, %c0_17, %c0_18] : memref<2x8x128xf32, #tpu.memory_space<vmem>>, vector<1x8x128xf32>
    %29 = vector.shape_cast %28 : vector<1x8x128xf32> to vector<8x128xf32>
    %30 = vector.shape_cast %27 : vector<8x128xf32> to vector<1x8x128xf32>
    tpu.vector_store %arg9[%c0_16, %c0_17, %c0_18], %30 {strides = array<i32>} : memref<2x8x128xf32, #tpu.memory_space<vmem>>, vector<1x8x128xf32>,
    %cst_19 = arith.constant dense<0.000000e+00> : vector<8x128xf32>
    %31 = tpu.matmul %20, %7, %cst_19 {dimension_numbers = #tpu.dot_dimension_numbers<[1], [0], [0], [1], [0, 0, 1, 1], [], []>} : vector<8x8xf32>, vector<8x128xf32>, vector<8x128xf32> -> vector<8x128xf32>
    %32 = vector.extract_strided_slice %16 {offsets = [0, 0], sizes = [8, 1], strides = [1, 1]} : vector<8x128xf32> to vector<8x1xf32>
    %c0_20 = arith.constant 0 : index
    %c0_21 = arith.constant 0 : index
    %c0_22 = arith.constant 0 : index
    %33 = vector.load %arg10[%c0_20, %c0_21, %c0_22] : memref<2x8x128xf32, #tpu.memory_space<vmem>>, vector<1x8x128xf32>
    %34 = vector.shape_cast %33 : vector<1x8x128xf32> to vector<8x128xf32>
    %35 = vector.broadcast %32 : vector<8x1xf32> to vector<8x128xf32>
    %36 = arith.mulf %35, %34 : vector<8x128xf32>
    %37 = arith.addf %36, %31 : vector<8x128xf32>
    %c0_23 = arith.constant 0 : index
    %c0_24 = arith.constant 0 : index
    %c0_25 = arith.constant 0 : index
    %38 = vector.load %arg10[%c0_23, %c0_24, %c0_25] : memref<2x8x128xf32, #tpu.memory_space<vmem>>, vector<1x8x128xf32>
    %39 = vector.shape_cast %38 : vector<1x8x128xf32> to vector<8x128xf32>
    %40 = vector.shape_cast %37 : vector<8x128xf32> to vector<1x8x128xf32>
    tpu.vector_store %arg10[%c0_23, %c0_24, %c0_25], %40 {strides = array<i32>} : memref<2x8x128xf32, #tpu.memory_space<vmem>>, vector<1x8x128xf32>,
    %c0_26 = arith.constant 0 : index
    %c0_27 = arith.constant 0 : index
    %c0_28 = arith.constant 0 : index
    %41 = vector.load %arg8[%c0_26, %c0_27, %c0_28] : memref<2x8x128xf32, #tpu.memory_space<vmem>>, vector<1x8x128xf32>
    %42 = vector.shape_cast %41 : vector<1x8x128xf32> to vector<8x128xf32>
    %43 = vector.shape_cast %14 : vector<8x128xf32> to vector<1x8x128xf32>
    tpu.vector_store %arg8[%c0_26, %c0_27, %c0_28], %43 {strides = array<i32>} : memref<2x8x128xf32, #tpu.memory_space<vmem>>, vector<1x8x128xf32>,
    %c1 = arith.constant 1 : index
    %c0_29 = arith.constant 0 : index
    %c0_30 = arith.constant 0 : index
    %44 = vector.load %arg4[%c1, %c0_29, %c0_30] : memref<2x8x32xf32, #tpu.memory_space<vmem>>, vector<1x8x32xf32>
    %45 = vector.shape_cast %44 : vector<1x8x32xf32> to vector<8x32xf32>
    %c1_31 = arith.constant 1 : index
    %c0_32 = arith.constant 0 : index
    %c0_33 = arith.constant 0 : index
    %46 = vector.load %arg5[%c1_31, %c0_32, %c0_33] : memref<2x8x128xf32, #tpu.memory_space<vmem>>, vector<1x8x128xf32>
    %47 = vector.shape_cast %46 : vector<1x8x128xf32> to vector<8x128xf32>
    %cst_34 = arith.constant dense<0.000000e+00> : vector<8x8xf32>
    %48 = tpu.matmul %3, %45, %cst_34 {dimension_numbers = #tpu.dot_dimension_numbers<[1], [1], [0], [0], [0, 0, 1, 0], [], []>} : vector<8x32xf32>, vector<8x32xf32>, vector<8x8xf32> -> vector<8x8xf32>
    %c1_35 = arith.constant 1 : index
    %c0_36 = arith.constant 0 : index
    %c0_37 = arith.constant 0 : index
    %49 = vector.load %arg8[%c1_35, %c0_36, %c0_37] : memref<2x8x128xf32, #tpu.memory_space<vmem>>, vector<1x8x128xf32>
    %50 = vector.shape_cast %49 : vector<1x8x128xf32> to vector<8x128xf32>
    %cst_38 = arith.constant dense<0xFF800000> : vector<8xf32>
    %51 = vector.multi_reduction <maximumf>, %48, %cst_38 [1] : vector<8x8xf32> to vector<8xf32>
    %52 = vector.shape_cast %51 : vector<8xf32> to vector<8x1xf32>
    %53 = vector.broadcast %52 : vector<8x1xf32> to vector<8x128xf32>
    %54 = arith.maximumf %50, %53 : vector<8x128xf32>
    %55 = arith.subf %50, %54 : vector<8x128xf32>
    %56 = math.exp %55 : vector<8x128xf32>
    %57 = vector.extract_strided_slice %54 {offsets = [0, 0], sizes = [8, 1], strides = [1, 1]} : vector<8x128xf32> to vector<8x1xf32>
    %58 = vector.broadcast %57 : vector<8x1xf32> to vector<8x8xf32>
    %59 = arith.subf %48, %58 : vector<8x8xf32>
    %60 = math.exp %59 : vector<8x8xf32>
    %c1_39 = arith.constant 1 : index
    %c0_40 = arith.constant 0 : index
    %c0_41 = arith.constant 0 : index
    %61 = vector.load %arg9[%c1_39, %c0_40, %c0_41] : memref<2x8x128xf32, #tpu.memory_space<vmem>>, vector<1x8x128xf32>
    %62 = vector.shape_cast %61 : vector<1x8x128xf32> to vector<8x128xf32>
    %63 = arith.mulf %56, %62 : vector<8x128xf32>
    %cst_42 = arith.constant dense<0.000000e+00> : vector<8xf32>
    %64 = vector.multi_reduction <add>, %60, %cst_42 [1] : vector<8x8xf32> to vector<8xf32>
    %65 = vector.shape_cast %64 : vector<8xf32> to vector<8x1xf32>
    %66 = vector.broadcast %65 : vector<8x1xf32> to vector<8x128xf32>
    %67 = arith.addf %63, %66 : vector<8x128xf32>
    %c1_43 = arith.constant 1 : index
    %c0_44 = arith.constant 0 : index
    %c0_45 = arith.constant 0 : index
    %68 = vector.load %arg9[%c1_43, %c0_44, %c0_45] : memref<2x8x128xf32, #tpu.memory_space<vmem>>, vector<1x8x128xf32>
    %69 = vector.shape_cast %68 : vector<1x8x128xf32> to vector<8x128xf32>
    %70 = vector.shape_cast %67 : vector<8x128xf32> to vector<1x8x128xf32>
    tpu.vector_store %arg9[%c1_43, %c0_44, %c0_45], %70 {strides = array<i32>} : memref<2x8x128xf32, #tpu.memory_space<vmem>>, vector<1x8x128xf32>,
    %cst_46 = arith.constant dense<0.000000e+00> : vector<8x128xf32>
    %71 = tpu.matmul %60, %47, %cst_46 {dimension_numbers = #tpu.dot_dimension_numbers<[1], [0], [0], [1], [0, 0, 1, 1], [], []>} : vector<8x8xf32>, vector<8x128xf32>, vector<8x128xf32> -> vector<8x128xf32>
    %72 = vector.extract_strided_slice %56 {offsets = [0, 0], sizes = [8, 1], strides = [1, 1]} : vector<8x128xf32> to vector<8x1xf32>
    %c1_47 = arith.constant 1 : index
    %c0_48 = arith.constant 0 : index
    %c0_49 = arith.constant 0 : index
    %73 = vector.load %arg10[%c1_47, %c0_48, %c0_49] : memref<2x8x128xf32, #tpu.memory_space<vmem>>, vector<1x8x128xf32>
    %74 = vector.shape_cast %73 : vector<1x8x128xf32> to vector<8x128xf32>
    %75 = vector.broadcast %72 : vector<8x1xf32> to vector<8x128xf32>
    %76 = arith.mulf %75, %74 : vector<8x128xf32>
    %77 = arith.addf %76, %71 : vector<8x128xf32>
    %c1_50 = arith.constant 1 : index
    %c0_51 = arith.constant 0 : index
    %c0_52 = arith.constant 0 : index
    %78 = vector.load %arg10[%c1_50, %c0_51, %c0_52] : memref<2x8x128xf32, #tpu.memory_space<vmem>>, vector<1x8x128xf32>
    %79 = vector.shape_cast %78 : vector<1x8x128xf32> to vector<8x128xf32>
    %80 = vector.shape_cast %77 : vector<8x128xf32> to vector<1x8x128xf32>
    tpu.vector_store %arg10[%c1_50, %c0_51, %c0_52], %80 {strides = array<i32>} : memref<2x8x128xf32, #tpu.memory_space<vmem>>, vector<1x8x128xf32>,
    %c1_53 = arith.constant 1 : index
    %c0_54 = arith.constant 0 : index
    %c0_55 = arith.constant 0 : index
    %81 = vector.load %arg8[%c1_53, %c0_54, %c0_55] : memref<2x8x128xf32, #tpu.memory_space<vmem>>, vector<1x8x128xf32>
    %82 = vector.shape_cast %81 : vector<1x8x128xf32> to vector<8x128xf32>
    %83 = vector.shape_cast %54 : vector<8x128xf32> to vector<1x8x128xf32>
    tpu.vector_store %arg8[%c1_53, %c0_54, %c0_55], %83 {strides = array<i32>} : memref<2x8x128xf32, #tpu.memory_space<vmem>>, vector<1x8x128xf32>,
    %c1_i32 = arith.constant 1 : i32
    %84 = arith.cmpi eq, %arg2, %c1_i32 : i32
    %85 = arith.extui %84 : i1 to i32
    %c0_i32_56 = arith.constant 0 : i32
    %86 = arith.cmpi ne, %85, %c0_i32_56 : i32
    scf.if %86 {
      %c0_57 = arith.constant 0 : index
      %c0_58 = arith.constant 0 : index
      %c0_59 = arith.constant 0 : index
      %87 = vector.load %arg9[%c0_57, %c0_58, %c0_59] : memref<2x8x128xf32, #tpu.memory_space<vmem>>, vector<2x8x128xf32>
      %88 = vector.extract_strided_slice %87 {offsets = [0, 0, 0], sizes = [2, 8, 1], strides = [1, 1, 1]} : vector<2x8x128xf32> to vector<2x8x1xf32>
      %89 = tpu.reciprocal %88 : vector<2x8x1xf32> -> vector<2x8x1xf32>
      %c0_60 = arith.constant 0 : index
      %c0_61 = arith.constant 0 : index
      %c0_62 = arith.constant 0 : index
      %90 = vector.load %arg10[%c0_60, %c0_61, %c0_62] : memref<2x8x128xf32, #tpu.memory_space<vmem>>, vector<2x8x128xf32>
      %91 = vector.broadcast %89 : vector<2x8x1xf32> to vector<2x8x128xf32>
      %92 = arith.mulf %90, %91 : vector<2x8x128xf32>
      %c0_63 = arith.constant 0 : index
      %c0_64 = arith.constant 0 : index
      %c0_65 = arith.constant 0 : index
      %93 = vector.load %arg6[%c0_63, %c0_64, %c0_65] : memref<2x8x128xf32, #tpu.memory_space<vmem>>, vector<2x8x128xf32>
      tpu.vector_store %arg6[%c0_63, %c0_64, %c0_65], %92 {strides = array<i32>} : memref<2x8x128xf32, #tpu.memory_space<vmem>>, vector<2x8x128xf32>,
    } else {
    }
    return
  }
  func.func @transform_0(%arg0: i32, %arg1: i32, %arg2: i32) -> (i32, i32) {
    %c0_i32 = arith.constant 0 : i32
    %c0_i32_0 = arith.constant 0 : i32
    return %arg1, %c0_i32 : i32, i32
  }
  func.func @transform_1(%arg0: i32, %arg1: i32, %arg2: i32) -> (i32, i32, i32) {
    %c0_i32 = arith.constant 0 : i32
    %c0_i32_0 = arith.constant 0 : i32
    return %arg0, %arg2, %c0_i32 : i32, i32, i32
  }
  func.func @transform_2(%arg0: i32, %arg1: i32, %arg2: i32) -> (i32, i32, i32) {
    %c0_i32 = arith.constant 0 : i32
    %c0_i32_0 = arith.constant 0 : i32
    return %arg0, %arg2, %c0_i32 : i32, i32, i32
  }
  func.func @transform_3(%arg0: i32, %arg1: i32, %arg2: i32) -> (i32, i32, i32) {
    %c0_i32 = arith.constant 0 : i32
    %c0_i32_0 = arith.constant 0 : i32
    return %arg0, %arg1, %c0_i32 : i32, i32, i32
  }
}

</mosaic_0001>

<llo_original>
// kernel: tpu_custom_call.1
$region0: #{tpu_custom_call.1}
  #allocation0 [shape = 'u32[]', space=smem, size = 0x4, offset = 0x4, fixed_abs, tag = 'smem constant byte address 0x4 - core index']
  #allocation1 [shape = 'u32[72,128]{1,0:T(1,128)}', space=vmem, size = 0x9000, scoped, tag = 'internal scratch']
  #allocation2 [shape = 'f32[8,32]{1,0:T(8,128)}', space=vmem, size = 0x1000, scoped, tag = 'scratch operand']
  #allocation3 [shape = 'f32[2,8,128]{2,1,0:T(8,128)}', space=vmem, size = 0x2000, scoped, tag = 'scratch operand']
  #allocation4 [shape = 'f32[2,8,128]{2,1,0:T(8,128)}', space=vmem, size = 0x2000, scoped, tag = 'scratch operand']
  #allocation5 [shape = 'f32[2,8,128]{2,1,0:T(8,128)}', space=vmem, size = 0x2000, scoped, tag = 'scratch operand']
  %s0 = inlined_call_operand.hbm [shape: f32[16,32], index: 0, kind: input, shape index: {}]
  %s1 = inlined_call_operand.hbm [shape: f32[4,16,32], index: 1, kind: input, shape index: {}]
  %s2 = inlined_call_operand.hbm [shape: f32[4,16,128], index: 2, kind: input, shape index: {}]
  %s3 = inlined_call_operand.hbm [shape: f32[4,16,128], index: 3, kind: output, shape index: {}]
  %s4 = sld [smem:[#allocation0]]
  $region65: #{tpu_custom_call.1} parent=0
    _
  %s6 = ssub.s32 1, %s4
  %s7 = scalar_select 0, %s6, %s4
  $region1: #{tpu_custom_call.1} parent=0
    #allocation6 [shape = 'u8[8192]{0}', space=vmem, size = 0x2000, scoped, tag = 'input window, operand 0']
    #allocation7 [shape = 's32[2]{0}', space=sflag, size = 0x8, scoped, tag = 'scoped memory for tpu_custom_call.1']
    #allocation8 [shape = 's32[2]{0}', space=sflag, size = 0x8, scoped, tag = 'scoped memory for tpu_custom_call.1']
    #allocation9 [shape = 'u8[16384]{0}', space=vmem, size = 0x4000, scoped, tag = 'input window, operand 1']
    #allocation10 [shape = 's32[2]{0}', space=sflag, size = 0x8, scoped, tag = 'scoped memory for tpu_custom_call.1']
    #allocation11 [shape = 'u8[16384]{0}', space=vmem, size = 0x4000, scoped, tag = 'input window, operand 2']
    #allocation12 [shape = 'u8[16384]{0}', space=vmem, size = 0x4000, scoped, tag = 'output window, operand 0']
    %8 = vsyncpa [#allocation7], 0
    %s9 = scalar_lea.sflag [#allocation7], 1
    %10 = vsyncpa %s9, 0
    %11 = vsyncpa [#allocation10], 0
    %s12 = scalar_lea.sflag [#allocation10], 1
    %13 = vsyncpa %s12, 0
    %14 = vsyncpa [#allocation8], 0
    %s15 = scalar_lea.sflag [#allocation8], 1
    %16 = vsyncpa %s15, 0
    loop: start=0, step=1, limit=10
    $region2: #{tpu_custom_call.1} parent=1 // loop_pre_header
      _
    $region3: #{tpu_custom_call.1} parent=1 // loop_header
      %s18 = sphi 0, %s22
      %p19 = scmp.ge.s32.totalorder %s18, 10
      %s25 = sphi 0, %s44
      %s26 = sphi 0, %s40
      %s27 = sphi 0, %s36
      %s28 = sphi 0, %s25
      %s29 = sphi 0, %s26
      %s30 = sphi 0, %s27
      %s31 = sphi 0, %s28
      %s32 = sphi 0, %s29
      %s33 = sphi 0, %s30
      %s47 = sphi 0, %s49
      %s50 = sphi 0, %s47
      %s51 = sphi 0, %s50
      %s67 = sphi 0, %s51
      %s75 = sphi 0, %s77
      %s78 = sphi 0, %s75
      %s79 = sphi 0, %s78
      %s95 = sphi 0, %s79
      %s103 = sphi 0, %s105
      %s106 = sphi 0, %s103
      %s107 = sphi 0, %s106
      %s123 = sphi 0, %s107
      %s131 = sphi 0, %s133
      %s134 = sphi 0, %s131
      %s135 = sphi 0, %s134
      %s151 = sphi 0, %s135
    $region4: #{tpu_custom_call.1} parent=1 // loop_header_branch
      %21 = sbr.rel (%p19) target = $region8
    $region5: #{tpu_custom_call.1} parent=1 // loop_body
      %s23 = ssub.s32 %s18, 1
      %s24 = ssub.s32 %s18, 2
      %s34 = sadd.s32 1, %s27
      %p35 = scmp.ge.s32.totalorder %s34, 2
      %s36 = scalar_select %p35, 0, %s34
      %s37 = sadd.s32 1, %s26
      %s38 = scalar_select %p35, %s37, %s26
      %p39 = scmp.ge.s32.totalorder %s38, 2
      %s40 = scalar_select %p39, 0, %s38
      %s41 = sadd.s32 1, %s25
      %s42 = scalar_select %p39, %s41, %s25
      %p43 = scmp.ge.s32.totalorder %s42, 2
      %s44 = scalar_select %p43, 0, %s42
      %s45 = ssub.s32 %s26, %s40
      %p46 = scmp.eq.s32.totalorder %s45, 0
      %s48 = sadd.s32 %s47, 1
      %s49 = scalar_select %p46, %s47, %s48
      %p52 = pneg %p46
      %p53 = scmp.eq.s32.totalorder %s18, 7
      %p54 = por %p52, %p53
      %p55 = scmp.ne.s32.totalorder %s47, %s50
      %p56 = scmp.eq.s32.totalorder %s18, 0
      %p57 = por %p55, %p56
      %p58 = scmp.ne.s32.totalorder %s47, %s50
      %p59 = scmp.eq.s32.totalorder %s23, 7
      %p60 = por %p58, %p59
      %p61 = scmp.ne.s32.totalorder %s50, %s51
      %p62 = scmp.eq.s32.totalorder %s23, 0
      %p63 = por %p61, %p62
      %p64 = scmp.ne.s32.totalorder %s50, %s51
      %p65 = scmp.eq.s32.totalorder %s24, 7
      %p66 = por %p64, %p65
      %p68 = scmp.ne.s32.totalorder %s51, %s67
      %p69 = scmp.eq.s32.totalorder %s24, 0
      %p70 = por %p68, %p69
      %s71 = ssub.s32 %s25, %s44
      %s72 = ssub.s32 %s27, %s36
      %s73 = sor.u32 %s71, %s72
      %p74 = scmp.eq.s32.totalorder %s73, 0
      %s76 = sadd.s32 %s75, 1
      %s77 = scalar_select %p74, %s75, %s76
      %p80 = pneg %p74
      %p81 = scmp.eq.s32.totalorder %s18, 7
      %p82 = por %p80, %p81
      %p83 = scmp.ne.s32.totalorder %s75, %s78
      %p84 = scmp.eq.s32.totalorder %s18, 0
      %p85 = por %p83, %p84
      %p86 = scmp.ne.s32.totalorder %s75, %s78
      %p87 = scmp.eq.s32.totalorder %s23, 7
      %p88 = por %p86, %p87
      %p89 = scmp.ne.s32.totalorder %s78, %s79
      %p90 = scmp.eq.s32.totalorder %s23, 0
      %p91 = por %p89, %p90
      %p92 = scmp.ne.s32.totalorder %s78, %s79
      %p93 = scmp.eq.s32.totalorder %s24, 7
      %p94 = por %p92, %p93
      %p96 = scmp.ne.s32.totalorder %s79, %s95
      %p97 = scmp.eq.s32.totalorder %s24, 0
      %p98 = por %p96, %p97
      %s99 = ssub.s32 %s25, %s44
      %s100 = ssub.s32 %s27, %s36
      %s101 = sor.u32 %s99, %s100
      %p102 = scmp.eq.s32.totalorder %s101, 0
      %s104 = sadd.s32 %s103, 1
      %s105 = scalar_select %p102, %s103, %s104
      %p108 = pneg %p102
      %p109 = scmp.eq.s32.totalorder %s18, 7
      %p110 = por %p108, %p109
      %p111 = scmp.ne.s32.totalorder %s103, %s106
      %p112 = scmp.eq.s32.totalorder %s18, 0
      %p113 = por %p111, %p112
      %p114 = scmp.ne.s32.totalorder %s103, %s106
      %p115 = scmp.eq.s32.totalorder %s23, 7
      %p116 = por %p114, %p115
      %p117 = scmp.ne.s32.totalorder %s106, %s107
      %p118 = scmp.eq.s32.totalorder %s23, 0
      %p119 = por %p117, %p118
      %p120 = scmp.ne.s32.totalorder %s106, %s107
      %p121 = scmp.eq.s32.totalorder %s24, 7
      %p122 = por %p120, %p121
      %p124 = scmp.ne.s32.totalorder %s107, %s123
      %p125 = scmp.eq.s32.totalorder %s24, 0
      %p126 = por %p124, %p125
      %s127 = ssub.s32 %s25, %s44
      %s128 = ssub.s32 %s26, %s40
      %s129 = sor.u32 %s127, %s128
      %p130 = scmp.eq.s32.totalorder %s129, 0
      %s132 = sadd.s32 %s131, 1
      %s133 = scalar_select %p130, %s131, %s132
      %p136 = pneg %p130
      %p137 = scmp.eq.s32.totalorder %s18, 7
      %p138 = por %p136, %p137
      %p139 = scmp.ne.s32.totalorder %s131, %s134
      %p140 = scmp.eq.s32.totalorder %s18, 0
      %p141 = por %p139, %p140
      %p142 = scmp.ne.s32.totalorder %s131, %s134
      %p143 = scmp.eq.s32.totalorder %s23, 7
      %p144 = por %p142, %p143
      %p145 = scmp.ne.s32.totalorder %s134, %s135
      %p146 = scmp.eq.s32.totalorder %s23, 0
      %p147 = por %p145, %p146
      %p148 = scmp.ne.s32.totalorder %s134, %s135
      %p149 = scmp.eq.s32.totalorder %s24, 7
      %p150 = por %p148, %p149
      %p152 = scmp.ne.s32.totalorder %s135, %s151
      %p153 = scmp.eq.s32.totalorder %s24, 0
      %p154 = por %p152, %p153
      %p155 = scmp.le.s32.totalorder 1, %s18
      %p156 = scmp.lt.s32.totalorder %s18, 9
      %p157 = pnand %p155, %p156
      %p158 = pneg %p157
      // Predicated region
      $region9: #{tpu_custom_call.1} parent=5 // pred_check
        _
      $region10: #{tpu_custom_call.1} parent=5 // pred_check_branch
        %160 = sbr.rel (%p157) target = $region12
      $region11: #{tpu_custom_call.1} parent=5 // pred_region
        %s161 = ssub.s32 %s18, 1
      $region12: #{tpu_custom_call.1} parent=5 // pred_fallthru
        _
      %p162 = scmp.lt.s32.totalorder %s18, 8
      // Predicated region
      $region13: #{tpu_custom_call.1} parent=5 // pred_check
        %p163 = pneg %p162
      $region14: #{tpu_custom_call.1} parent=5 // pred_check_branch
        %165 = sbr.rel (%p163) target = $region16
      $region15: #{tpu_custom_call.1} parent=5 // pred_region
        // Predicated region
        $region17: #{tpu_custom_call.1} parent=15 // pred_check
          %p166 = pneg %p57
        $region18: #{tpu_custom_call.1} parent=15 // pred_check_branch
          %168 = sbr.rel (%p166) target = $region20
        $region19: #{tpu_custom_call.1} parent=15 // pred_region
          %s169 = sand.u32 %s47, 1
          %s170 = scalar_lea.sflag [#allocation7], %s169
          %s171 = sand.u32 %s47, 1
          %s172 = smul.addr %s171, 8
          %s173 = scalar_lea.vmem [#allocation6], %s172
          %175 = vsyncadd %s170, 0
          %s176 = smul.addr %s26, 8
          %s177 = scalar_lea.hbm %s0, %s176
          %s179 = sshll.u32 %s177, 4
          %s180 = int_to_ptr.hbm [resolvable:$true] %s179
          %s181 = sshll.u32 %s173, 4
          %s182 = int_to_ptr.vmem [resolvable:$true] %s181
          %184 = dma.hbm_to_vmem [thread:$0]  %s180, 128, %s182, %s170
        $region20: #{tpu_custom_call.1} parent=15 // pred_fallthru
          _
        // Predicated region
        $region21: #{tpu_custom_call.1} parent=15 // pred_check
          %p185 = pneg %p85
        $region22: #{tpu_custom_call.1} parent=15 // pred_check_branch
          %187 = sbr.rel (%p185) target = $region24
        $region23: #{tpu_custom_call.1} parent=15 // pred_region
          %s188 = sand.u32 %s18, 1
          %s189 = scalar_lea.sflag [#allocation10], %s188
          %s190 = sand.u32 %s75, 1
          %s191 = smul.addr %s190, 16
          %s192 = scalar_lea.vmem [#allocation9], %s191
          %s193 = smul.u32 2, %s25
          %195 = vsyncadd %s189, 0
          %s196 = smul.addr %s193, 2
          %s197 = sadd.s32 %s27, %s196
          %s198 = smul.addr %s197, 8
          %s199 = scalar_lea.hbm %s1, %s198
          %s200 = sshll.u32 %s199, 4
          %s201 = int_to_ptr.hbm [resolvable:$true] %s200
          %s202 = sshll.u32 %s192, 4
          %s203 = int_to_ptr.vmem [resolvable:$true] %s202
          %208 = dma.hbm_to_vmem [thread:$0]  %s201, 256, %s203, %s189, 256, 128, 8
        $region24: #{tpu_custom_call.1} parent=15 // pred_fallthru
          _
        // Predicated region
        $region25: #{tpu_custom_call.1} parent=15 // pred_check
          %p209 = pneg %p113
        $region26: #{tpu_custom_call.1} parent=15 // pred_check_branch
          %211 = sbr.rel (%p209) target = $region28
        $region27: #{tpu_custom_call.1} parent=15 // pred_region
          %s212 = sand.u32 %s18, 1
          %s213 = scalar_lea.sflag [#allocation10], %s212
          %s214 = sand.u32 %s103, 1
          %s215 = smul.addr %s214, 16
          %s216 = scalar_lea.vmem [#allocation11], %s215
          %s217 = smul.u32 2, %s25
          %219 = vsyncadd %s213, 0
          %s220 = smul.addr %s217, 2
          %s221 = sadd.s32 %s27, %s220
          %s222 = smul.addr %s221, 8
          %s223 = scalar_lea.hbm %s2, %s222
          %s224 = sshll.u32 %s223, 4
          %s225 = int_to_ptr.hbm [resolvable:$true] %s224
          %s226 = sshll.u32 %s216, 4
          %s227 = int_to_ptr.vmem [resolvable:$true] %s226
          %232 = dma.hbm_to_vmem [thread:$0]  %s225, 256, %s227, %s213, 256, 128, 8
        $region28: #{tpu_custom_call.1} parent=15 // pred_fallthru
          _
      $region16: #{tpu_custom_call.1} parent=5 // pred_fallthru
        _
      %p233 = scmp.le.s32.totalorder 1, %s18
      %p234 = scmp.lt.s32.totalorder %s18, 9
      %p235 = pnand %p233, %p234
      %p236 = pneg %p235
      // Predicated region
      $region29: #{tpu_custom_call.1} parent=5 // pred_check
        _
      $region30: #{tpu_custom_call.1} parent=5 // pred_check_branch
        %238 = sbr.rel (%p235) target = $region32
      $region31: #{tpu_custom_call.1} parent=5 // pred_region
        %s239 = ssub.s32 %s18, 1
        %s240 = sand.u32 %s50, 1
        %s241 = scalar_lea.sflag [#allocation7], %s240
        %s242 = sand.u32 %s50, 1
        %s243 = smul.addr %s242, 8
        %s244 = scalar_lea.vmem [#allocation6], %s243
        // Predicated region
        $region33: #{tpu_custom_call.1} parent=31 // pred_check
          %p245 = pneg %p63
        $region34: #{tpu_custom_call.1} parent=31 // pred_check_branch
          %247 = sbr.rel (%p245) target = $region36
        $region35: #{tpu_custom_call.1} parent=31 // pred_region
          %249 = dma.done %s241, 128
        $region36: #{tpu_custom_call.1} parent=31 // pred_fallthru
          _
        %s250 = sand.u32 %s23, 1
        %s251 = scalar_lea.sflag [#allocation10], %s250
        %s252 = sand.u32 %s78, 1
        %s253 = smul.addr %s252, 16
        %s254 = scalar_lea.vmem [#allocation9], %s253
        // Predicated region
        $region37: #{tpu_custom_call.1} parent=31 // pred_check
          %p255 = pneg %p91
        $region38: #{tpu_custom_call.1} parent=31 // pred_check_branch
          %257 = sbr.rel (%p255) target = $region40
        $region39: #{tpu_custom_call.1} parent=31 // pred_region
          %259 = dma.done %s251, 256
        $region40: #{tpu_custom_call.1} parent=31 // pred_fallthru
          _
        %s260 = sand.u32 %s23, 1
        %s261 = scalar_lea.sflag [#allocation10], %s260
        %s262 = sand.u32 %s106, 1
        %s263 = smul.addr %s262, 16
        %s264 = scalar_lea.vmem [#allocation11], %s263
        // Predicated region
        $region41: #{tpu_custom_call.1} parent=31 // pred_check
          %p265 = pneg %p119
        $region42: #{tpu_custom_call.1} parent=31 // pred_check_branch
          %267 = sbr.rel (%p265) target = $region44
        $region43: #{tpu_custom_call.1} parent=31 // pred_region
          %269 = dma.done %s261, 256
        $region44: #{tpu_custom_call.1} parent=31 // pred_fallthru
          _
        %s270 = sand.u32 %s50, 1
        %s271 = scalar_lea.sflag [#allocation7], %s270
        %s272 = sand.u32 %s50, 1
        %s273 = smul.addr %s272, 8
        %s274 = scalar_lea.vmem [#allocation6], %s273
        %p275 = pneg %p63
        %p276 = pneg %p60
        %s277 = sand.u32 %s23, 1
        %s278 = scalar_lea.sflag [#allocation10], %s277
        %s279 = sand.u32 %s78, 1
        %s280 = smul.addr %s279, 16
        %s281 = scalar_lea.vmem [#allocation9], %s280
        %p282 = pneg %p91
        %p283 = pneg %p88
        %s284 = sand.u32 %s23, 1
        %s285 = scalar_lea.sflag [#allocation10], %s284
        %s286 = sand.u32 %s106, 1
        %s287 = smul.addr %s286, 16
        %s288 = scalar_lea.vmem [#allocation11], %s287
        %p289 = pneg %p119
        %p290 = pneg %p116
        %p291 = pneg %p147
        %p292 = pneg %p144
        %s293 = sand.u32 %s134, 1
        %s294 = scalar_lea.sflag [#allocation8], %s293
        %s295 = sand.u32 %s134, 1
        %s296 = smul.addr %s295, 16
        %s297 = scalar_lea.vmem [#allocation12], %s296
        %s298 = smul.u32 2, %s28
        %s299 = smul.u32 2, %s28
        %s300 = smul.u32 2, %s28
        %p301 = scmp.eq.s32.totalorder %s30, 0
        // Predicated region
        $region45: #{tpu_custom_call.1} parent=31 // pred_check
          %p302 = pneg %p301
        $region46: #{tpu_custom_call.1} parent=31 // pred_check_branch
          %304 = sbr.rel (%p302) target = $region48
        $region47: #{tpu_custom_call.1} parent=31 // pred_region
          %v305 = vld [vmem:[%s244] sm:$0xff]
          %v306 = vmul.f32 %v305, 1e-05
          %vm307 = vcmask 261120
          %308 = vst.msk [vmem:[#allocation2] sm:$0xff] %vm307, %v306
          %309 = vst [vmem:[#allocation3] sm:$0xff] -inf
          %310 = vst [vmem:[#allocation3 + $0x8] sm:$0xff] -inf
          %311 = vst [vmem:[#allocation4] sm:$0xff] 0.0
          %312 = vst [vmem:[#allocation4 + $0x8] sm:$0xff] 0.0
          %313 = vst [vmem:[#allocation5] sm:$0xff] 0.0
          %314 = vst [vmem:[#allocation5 + $0x8] sm:$0xff] 0.0
        $region48: #{tpu_custom_call.1} parent=31 // pred_fallthru
          _
        %v315 = vld [vmem:[#allocation2] sm:$0xff]
        %v316 = vld [vmem:[%s254] sm:$0xff]
        %v317 = vld [vmem:[%s264] sm:$0xff]
        %vm318 = vcmask 261120
        %v320 = vsel %vm318, %v315, 0
        %v323 = vsel %vm318, %v316, 0
        %325 = vmatpush.xpose.msra.mxu0 0.0
        %326 = vmatpush.xpose.msra.mxu0 0.0
        %327 = vmatpush.xpose.msra.mxu0 0.0
        %328 = vmatpush.xpose.msra.mxu0 0.0
        %329 = vmatpush.xpose.msra.mxu0 0.0
        %330 = vmatpush.xpose.msra.mxu0 0.0
        %331 = vmatpush.xpose.msra.mxu0 0.0
        %332 = vmatpush.xpose.msra.mxu0 0.0
        %333 = vmatpush.xpose.msra.mxu0 0.0
        %334 = vmatpush.xpose.msra.mxu0 0.0
        %335 = vmatpush.xpose.msra.mxu0 0.0
        %336 = vmatpush.xpose.msra.mxu0 0.0
        %337 = vmatpush.xpose.msra.mxu0 0.0
        %338 = vmatpush.xpose.msra.mxu0 0.0
        %339 = vmatpush.xpose.msra.mxu0 0.0
        %340 = vmatpush.xpose.msra.mxu0 %v323
        %341 = vmatmul.f32.gmra.mxu0 %v320
        %v342 = vpop.f32.mrf.mxu0
        %v343 = vadd.f32 0.0, %v342
        %344 = vdwg.mxu0
        %v345 = vld [vmem:[#allocation3] sm:$0xff]
        %vm346 = vcmask 64512
        %v347 = vsel %vm346, %v343, -inf
        %348 = vmax.xlane.f32.xlu0 %v347
        %v349 = vpop.xlane.xlu0 %348
        %v350 = vmax.f32 %v345, %v349
        %v351 = vsub.f32 %v345, %v350
        %v352 = vmul.f32 %v351, 1.442695
        %v353 = vpow.pop %v352
        %355 = vset.pattern.permute.xlu0 0
        %356 = vperm.xlu0 %355, %v350
        %v357 = vpop.permute.xlu0 %356
        %v359 = vsub.f32 %v343, %v357
        %v360 = vmul.f32 %v359, 1.442695
        %v361 = vpow.pop %v360
        %v362 = vld [vmem:[#allocation4] sm:$0xff]
        %v363 = vmul.f32 %v353, %v362
        %v364 = vsel %vm346, %v361, 0.0
        %365 = vadd.xlane.f32.xlu0 %v364
        %v366 = vpop.xlane.xlu0 %365
        %v367 = vadd.f32 %v363, %v366
        %368 = vst [vmem:[#allocation4] sm:$0xff] %v367
        %v370 = vsel %vm346, %v361, 0
        %372 = vmatpush.msra.mxu0 0.0
        %373 = vmatpush.msra.mxu0 0.0
        %374 = vmatpush.msra.mxu0 0.0
        %375 = vmatpush.msra.mxu0 0.0
        %376 = vmatpush.msra.mxu0 0.0
        %377 = vmatpush.msra.mxu0 0.0
        %378 = vmatpush.msra.mxu0 0.0
        %379 = vmatpush.msra.mxu0 0.0
        %380 = vmatpush.msra.mxu0 0.0
        %381 = vmatpush.msra.mxu0 0.0
        %382 = vmatpush.msra.mxu0 0.0
        %383 = vmatpush.msra.mxu0 0.0
        %384 = vmatpush.msra.mxu0 0.0
        %385 = vmatpush.msra.mxu0 0.0
        %386 = vmatpush.msra.mxu0 0.0
        %387 = vmatpush.msra.mxu0 %v317
        %388 = vmatmul.f32.gmra.mxu0 %v370
        %v389 = vpop.f32.mrf.mxu0
        %v390 = vadd.f32 0.0, %v389
        %391 = vdwg.mxu0
        %v392 = vld [vmem:[#allocation5] sm:$0xff]
        %394 = vset.pattern.permute.xlu0 0
        %395 = vperm.xlu0 %394, %v353
        %v396 = vpop.permute.xlu0 %395
        %v398 = vmul.f32 %v396, %v392
        %v399 = vadd.f32 %v398, %v390
        %400 = vst [vmem:[#allocation5] sm:$0xff] %v399
        %401 = vst [vmem:[#allocation3] sm:$0xff] %v350
        %s402 = scalar_lea.vmem %s254, 8 [#allocation9]
        %v403 = vld [vmem:[%s402] sm:$0xff]
        %s404 = scalar_lea.vmem %s264, 8 [#allocation11]
        %v405 = vld [vmem:[%s404] sm:$0xff]
        %v407 = vsel %vm318, %v403, 0
        %409 = vmatpush.xpose.msra.mxu0 0.0
        %410 = vmatpush.xpose.msra.mxu0 0.0
        %411 = vmatpush.xpose.msra.mxu0 0.0
        %412 = vmatpush.xpose.msra.mxu0 0.0
        %413 = vmatpush.xpose.msra.mxu0 0.0
        %414 = vmatpush.xpose.msra.mxu0 0.0
        %415 = vmatpush.xpose.msra.mxu0 0.0
        %416 = vmatpush.xpose.msra.mxu0 0.0
        %417 = vmatpush.xpose.msra.mxu0 0.0
        %418 = vmatpush.xpose.msra.mxu0 0.0
        %419 = vmatpush.xpose.msra.mxu0 0.0
        %420 = vmatpush.xpose.msra.mxu0 0.0
        %421 = vmatpush.xpose.msra.mxu0 0.0
        %422 = vmatpush.xpose.msra.mxu0 0.0
        %423 = vmatpush.xpose.msra.mxu0 0.0
        %424 = vmatpush.xpose.msra.mxu0 %v407
        %425 = vmatmul.f32.gmra.mxu0 %v320
        %v426 = vpop.f32.mrf.mxu0
        %v427 = vadd.f32 0.0, %v426
        %428 = vdwg.mxu0
        %s429 = scalar_lea.vmem [#allocation3], 8
        %v430 = vld [vmem:[%s429] sm:$0xff]
        %v431 = vsel %vm346, %v427, -inf
        %432 = vmax.xlane.f32.xlu0 %v431
        %v433 = vpop.xlane.xlu0 %432
        %v434 = vmax.f32 %v430, %v433
        %v435 = vsub.f32 %v430, %v434
        %v436 = vmul.f32 %v435, 1.442695
        %v437 = vpow.pop %v436
        %439 = vset.pattern.permute.xlu0 0
        %440 = vperm.xlu0 %439, %v434
        %v441 = vpop.permute.xlu0 %440
        %v443 = vsub.f32 %v427, %v441
        %v444 = vmul.f32 %v443, 1.442695
        %v445 = vpow.pop %v444
        %s446 = scalar_lea.vmem [#allocation4], 8
        %v447 = vld [vmem:[%s446] sm:$0xff]
        %v448 = vmul.f32 %v437, %v447
        %v449 = vsel %vm346, %v445, 0.0
        %450 = vadd.xlane.f32.xlu0 %v449
        %v451 = vpop.xlane.xlu0 %450
        %v452 = vadd.f32 %v448, %v451
        %453 = vst [vmem:[%s446] sm:$0xff] %v452
        %v455 = vsel %vm346, %v445, 0
        %457 = vmatpush.msra.mxu0 0.0
        %458 = vmatpush.msra.mxu0 0.0
        %459 = vmatpush.msra.mxu0 0.0
        %460 = vmatpush.msra.mxu0 0.0
        %461 = vmatpush.msra.mxu0 0.0
        %462 = vmatpush.msra.mxu0 0.0
        %463 = vmatpush.msra.mxu0 0.0
        %464 = vmatpush.msra.mxu0 0.0
        %465 = vmatpush.msra.mxu0 0.0
        %466 = vmatpush.msra.mxu0 0.0
        %467 = vmatpush.msra.mxu0 0.0
        %468 = vmatpush.msra.mxu0 0.0
        %469 = vmatpush.msra.mxu0 0.0
        %470 = vmatpush.msra.mxu0 0.0
        %471 = vmatpush.msra.mxu0 0.0
        %472 = vmatpush.msra.mxu0 %v405
        %473 = vmatmul.f32.gmra.mxu0 %v455
        %v474 = vpop.f32.mrf.mxu0
        %v475 = vadd.f32 0.0, %v474
        %476 = vdwg.mxu0
        %s477 = scalar_lea.vmem [#allocation5], 8
        %v478 = vld [vmem:[%s477] sm:$0xff]
        %480 = vset.pattern.permute.xlu0 0
        %481 = vperm.xlu0 %480, %v437
        %v482 = vpop.permute.xlu0 %481
        %v484 = vmul.f32 %v482, %v478
        %v485 = vadd.f32 %v484, %v475
        %486 = vst [vmem:[%s477] sm:$0xff] %v485
        %487 = vst [vmem:[%s429] sm:$0xff] %v434
        %p488 = scmp.eq.s32.totalorder %s30, 1
        // Predicated region
        $region49: #{tpu_custom_call.1} parent=31 // pred_check
          %p489 = pneg %p488
        $region50: #{tpu_custom_call.1} parent=31 // pred_check_branch
          %491 = sbr.rel (%p489) target = $region52
        $region51: #{tpu_custom_call.1} parent=31 // pred_region
          %v492 = vld [vmem:[#allocation4] sm:$0xff]
          %v493 = vld [vmem:[#allocation4 + $0x8] sm:$0xff]
          %v494 = vrcp.pop %v492
          %v495 = vmul.f32 %v492, %v494
          %v496 = vsub.f32 1.0, %v495
          %v497 = vmul.f32 %v494, %v496
          %v498 = vadd.f32 %v494, %v497
          %vm499 = vweird.f32 %v492
          %vm500 = vweird.f32 %v494
          %vm501 = vmor %vm499, %vm500
          %v502 = vsel %vm501, %v494, %v498
          %v503 = vand.u32 2147483647, %v492
          %vm504 = vcmp.eq.f32.partialorder %v503, 8.507059e+37
          %v505 = vand.u32 %v492, 2147483648
          %v506 = vor.u32 1.1754944e-38, %v505
          %v507 = vsel %vm504, %v506, %v502
          %v508 = vrcp.pop %v493
          %v509 = vmul.f32 %v493, %v508
          %v510 = vsub.f32 1.0, %v509
          %v511 = vmul.f32 %v508, %v510
          %v512 = vadd.f32 %v508, %v511
          %vm513 = vweird.f32 %v493
          %vm514 = vweird.f32 %v508
          %vm515 = vmor %vm513, %vm514
          %v516 = vsel %vm515, %v508, %v512
          %v517 = vand.u32 2147483647, %v493
          %vm518 = vcmp.eq.f32.partialorder %v517, 8.507059e+37
          %v519 = vand.u32 %v493, 2147483648
          %v520 = vor.u32 1.1754944e-38, %v519
          %v521 = vsel %vm518, %v520, %v516
          %v522 = vld [vmem:[#allocation5] sm:$0xff]
          %v523 = vld [vmem:[#allocation5 + $0x8] sm:$0xff]
          %525 = vset.pattern.permute.xlu0 0
          %526 = vperm.xlu0 %525, %v507
          %v527 = vpop.permute.xlu0 %526
          %530 = vset.pattern.permute.xlu0 0
          %531 = vperm.xlu0 %530, %v521
          %v532 = vpop.permute.xlu0 %531
          %v534 = vmul.f32 %v522, %v527
          %v535 = vmul.f32 %v523, %v532
          %536 = vst [vmem:[%s297] sm:$0xff] %v534
          %537 = vst [vmem:[%s297 + $0x8] sm:$0xff] %v535
        $region52: #{tpu_custom_call.1} parent=31 // pred_fallthru
          _
        %s538 = sand.u32 %s134, 1
        %s539 = scalar_lea.sflag [#allocation8], %s538
        %s540 = sand.u32 %s134, 1
        %s541 = smul.addr %s540, 16
        %s542 = scalar_lea.vmem [#allocation12], %s541
        // Predicated region
        $region53: #{tpu_custom_call.1} parent=31 // pred_check
          %p543 = pneg %p144
        $region54: #{tpu_custom_call.1} parent=31 // pred_check_branch
          %545 = sbr.rel (%p543) target = $region56
        $region55: #{tpu_custom_call.1} parent=31 // pred_region
          %s546 = smul.u32 2, %s28
          %548 = vsyncadd %s539, 0
          %s549 = smul.addr %s546, 2
          %s550 = sadd.s32 %s29, %s549
          %s551 = smul.addr %s550, 8
          %s552 = scalar_lea.hbm %s3, %s551
          %s553 = sshll.u32 %s542, 4
          %s554 = int_to_ptr.vmem [resolvable:$true] %s553
          %s555 = sshll.u32 %s552, 4
          %s556 = int_to_ptr.hbm [resolvable:$true] %s555
          %561 = dma.vmem_to_hbm [thread:$0]  %s554, 256, %s556, %s539, 128, 256, 8
        $region56: #{tpu_custom_call.1} parent=31 // pred_fallthru
          _
      $region32: #{tpu_custom_call.1} parent=5 // pred_fallthru
        _
      %p562 = scmp.le.s32.totalorder 2, %s18
      // Predicated region
      $region57: #{tpu_custom_call.1} parent=5 // pred_check
        %p563 = pneg %p562
      $region58: #{tpu_custom_call.1} parent=5 // pred_check_branch
        %565 = sbr.rel (%p563) target = $region60
      $region59: #{tpu_custom_call.1} parent=5 // pred_region
        %s566 = ssub.s32 %s18, 2
        // Predicated region
        $region61: #{tpu_custom_call.1} parent=59 // pred_check
          %p567 = pneg %p150
        $region62: #{tpu_custom_call.1} parent=59 // pred_check_branch
          %569 = sbr.rel (%p567) target = $region64
        $region63: #{tpu_custom_call.1} parent=59 // pred_region
          %s570 = sand.u32 %s135, 1
          %s571 = scalar_lea.sflag [#allocation8], %s570
          %s572 = sand.u32 %s135, 1
          %s573 = smul.addr %s572, 16
          %s574 = scalar_lea.vmem [#allocation12], %s573
          %576 = dma.done %s571, 256
        $region64: #{tpu_custom_call.1} parent=59 // pred_fallthru
          _
      $region60: #{tpu_custom_call.1} parent=5 // pred_fallthru
        _
    $region6: #{tpu_custom_call.1} parent=1 // loop_footer
      %s22 = sadd.s32 1, %s18
    $region7: #{tpu_custom_call.1} parent=1 // loop_footer_branch
      %17 = sbr.rel target = $region3
    $region8: #{tpu_custom_call.1} parent=1 // loop_exit
      _
    %577 = vsyncpa [#allocation7], 1
    %s578 = scalar_lea.sflag [#allocation7], 1
    %579 = vsyncpa %s578, 1
    %580 = vsyncpa [#allocation10], 1
    %s581 = scalar_lea.sflag [#allocation10], 1
    %582 = vsyncpa %s581, 1
    %583 = vsyncpa [#allocation8], 1
    %s584 = scalar_lea.sflag [#allocation8], 1
    %585 = vsyncpa %s584, 1

</llo_original>
